<compile_context>
chip_gen: v5e
topology: v5e:2x2
jax: 0.10.0
libtpu: 0.0.40
codegen_flags: <defaults>
</compile_context>

<pallas_src>
import functools

import jax
import jax.numpy as jnp
from jax.experimental import pallas as pl
from jax.experimental.pallas import tpu as pltpu

IN_FEATURES = 2 * 128   # 256
HIDDEN = 64
OUT_FEATURES = 2
W2_PAD = 128            # lane width of the resident W2^T slab in VMEM (HBM store stays narrow)
TILE_B_DEFAULT = 8192   # ~8 MiB f32 input per grid step; fits v5e/v6e/v7x VMEM budgets


def _round_up(x, m):
    return ((x + m - 1) // m) * m


def _classifier_kernel(x_ref, w1t_ref, b1_ref, w2t_ref, b2_ref, o_ref):
    # x_ref:   (TILE_B, 256) f32   batch tile (ragged last block masked by Pallas)
    # w1t_ref: (256, 64)     bf16  pre-transposed W1, grid-invariant
    # b1_ref:  (1, 64)       f32
    # w2t_ref: (64, 128)     bf16  pre-transposed W2, zero-padded to 128 lanes (VMEM only)
    # b2_ref:  (1, 2)        f32
    # o_ref:   (TILE_B, 2)   f32   narrow logits -> minimal HBM writeback
    x = x_ref[...].astype(jnp.bfloat16)          # in-kernel cast: free VPU work in a DMA-bound regime
    h = jnp.dot(x, w1t_ref[...], preferred_element_type=jnp.float32)
    h = jax.nn.sigmoid(h + b1_ref[...])          # bias + sigmoid in f32 (VPU/EUP; v5e-safe)
    out = jnp.dot(h.astype(jnp.bfloat16), w2t_ref[...],
                  preferred_element_type=jnp.float32)
    o_ref[...] = (out[:, :OUT_FEATURES] + b2_ref[...]).astype(o_ref.dtype)


@functools.partial(jax.jit, static_argnames=("tile_b",))
def target_classifier_forward(emb, w1, b1, w2, b2, *, tile_b=TILE_B_DEFAULT):
    """emb: (B, 2, 128) or any (B, ...) flattening to 256 features.

    w1: (64, 256), b1: (64,), w2: (2, 64), b2: (2,) — PyTorch nn.Linear convention.
    Returns (B, 2) float32 logits.
    """
    batch = emb.shape[0]
    x = emb.reshape(batch, -1)
    assert x.shape[1] == IN_FEATURES

    # Batch tiling: tile must be a multiple of 8 sublanes; Pallas masks the ragged
    # last block itself, so no wrapper-side pad (which would copy the whole array).
    tile_b = max(8, min(int(tile_b), _round_up(batch, 8)))
    tile_b = _round_up(tile_b, 8)
    grid = (pl.cdiv(batch, tile_b),)

    # Pre-transpose / pad weights once in the wrapper (no in-kernel XLU transpose).
    w1t = w1.T.astype(jnp.bfloat16)                                      # (256, 64)
    b1r = b1.reshape(1, HIDDEN).astype(jnp.float32)                      # (1, 64)
    w2t = jnp.zeros((HIDDEN, W2_PAD), jnp.bfloat16).at[:, :OUT_FEATURES].set(
        w2.T.astype(jnp.bfloat16))                                       # (64, 128)
    b2r = b2.reshape(1, OUT_FEATURES).astype(jnp.float32)                # (1, 2)

    # VMEM budget: double-buffered input/output tiles + resident weights + the
    # fused in-kernel intermediates (bf16 x, f32/bf16 hidden, f32 128-lane out).
    in_bytes_per_elem = jnp.dtype(x.dtype).itemsize
    in_tile_bytes = tile_b * IN_FEATURES * in_bytes_per_elem
    out_tile_bytes = tile_b * OUT_FEATURES * 4
    weight_bytes = (IN_FEATURES * HIDDEN * 2 + HIDDEN * 4
                    + HIDDEN * W2_PAD * 2 + OUT_FEATURES * 4)
    scratch_bytes = tile_b * (IN_FEATURES * 2      # bf16 cast of x tile
                              + HIDDEN * 4         # f32 hidden
                              + HIDDEN * 2         # bf16 hidden
                              + W2_PAD * 4)        # f32 pre-slice result
    vmem_limit = int(2 * (in_tile_bytes + out_tile_bytes + weight_bytes)
                     + scratch_bytes + (4 << 20))
    vmem_limit = max(32 << 20, min(vmem_limit, 64 << 20))   # v7x physical cap 64 MiB

    cost = pl.CostEstimate(
        flops=2 * batch * (IN_FEATURES * HIDDEN + HIDDEN * OUT_FEATURES),
        transcendentals=batch * HIDDEN,
        bytes_accessed=(batch * IN_FEATURES * in_bytes_per_elem   # activations in
                        + batch * OUT_FEATURES * 4                # narrow logits out
                        + weight_bytes),
    )

    return pl.pallas_call(
        _classifier_kernel,
        out_shape=jax.ShapeDtypeStruct((batch, OUT_FEATURES), jnp.float32),
        grid=grid,
        in_specs=[
            pl.BlockSpec((tile_b, IN_FEATURES), lambda i: (i, 0)),   # x batch tile
            pl.BlockSpec((IN_FEATURES, HIDDEN), lambda i: (0, 0)),   # W1^T resident
            pl.BlockSpec((1, HIDDEN), lambda i: (0, 0)),             # b1 resident
            pl.BlockSpec((HIDDEN, W2_PAD), lambda i: (0, 0)),        # W2^T resident
            pl.BlockSpec((1, OUT_FEATURES), lambda i: (0, 0)),       # b2 resident
        ],
        out_specs=pl.BlockSpec((tile_b, OUT_FEATURES), lambda i: (i, 0)),
        compiler_params=pltpu.CompilerParams(
            dimension_semantics=("parallel",),
            vmem_limit_bytes=vmem_limit,
        ),
        cost_estimate=cost,
    )(x, w1t, b1r, w2t, b2r)


def init_params(key):
    """Deterministic init mimicking nn.Linear's uniform(-1/sqrt(fan_in), 1/sqrt(fan_in))."""
    k1, k2, k3, k4 = jax.random.split(key, 4)
    bound1 = 1.0 / (IN_FEATURES ** 0.5)
    bound2 = 1.0 / (HIDDEN ** 0.5)
    w1 = jax.random.uniform(k1, (HIDDEN, IN_FEATURES), jnp.float32, -bound1, bound1)
    b1 = jax.random.uniform(k2, (HIDDEN,), jnp.float32, -bound1, bound1)
    w2 = jax.random.uniform(k3, (OUT_FEATURES, HIDDEN), jnp.float32, -bound2, bound2)
    b2 = jax.random.uniform(k4, (OUT_FEATURES,), jnp.float32, -bound2, bound2)
    return w1, b1, w2, b2


def reference_forward_f32(emb, w1, b1, w2, b2):
    """Pure-f32 module semantics (PyTorch reference)."""
    emb_flat = emb.reshape(emb.shape[0], -1)
    h = jax.nn.sigmoid(emb_flat @ w1.T + b1)
    return h @ w2.T + b2


def reference_forward_bf16(emb, w1, b1, w2, b2):
    """Reference matching the kernel's numerics (bf16 MXU operands, f32 accumulation)."""
    x = emb.reshape(emb.shape[0], -1).astype(jnp.bfloat16)
    h = jnp.dot(x, w1.T.astype(jnp.bfloat16), preferred_element_type=jnp.float32) + b1
    h = jax.nn.sigmoid(h).astype(jnp.bfloat16)
    return jnp.dot(h, w2.T.astype(jnp.bfloat16), preferred_element_type=jnp.float32) + b2


if __name__ == "__main__":
    key = jax.random.PRNGKey(0)
    k_emb, k_par = jax.random.split(key)

    w1, b1, w2, b2 = init_params(k_par)

    # Small shape consistent with the module: emb has 2*128 = 256 features/example.
    batch = 2
    emb = jax.random.normal(k_emb, (batch, 2, 128), jnp.float32)

    pred = target_classifier_forward(emb, w1, b1, w2, b2)
    pred = jax.block_until_ready(pred)
    assert pred.shape == (batch, OUT_FEATURES)
    assert jnp.allclose(pred, reference_forward_bf16(emb, w1, b1, w2, b2),
                        atol=1e-4, rtol=1e-4)
    assert jnp.allclose(pred, reference_forward_f32(emb, w1, b1, w2, b2),
                        atol=2e-2, rtol=2e-2)

    # Also exercise the multi-tile grid path with a ragged (non-multiple) batch
    # and a forced small tile -> grid of 3 with a masked partial last block.
    batch2 = 20
    emb2 = jax.random.normal(jax.random.PRNGKey(1), (batch2, 2, 128), jnp.float32)
    pred2 = jax.block_until_ready(
        target_classifier_forward(emb2, w1, b1, w2, b2, tile_b=8))
    assert pred2.shape == (batch2, OUT_FEATURES)
    assert jnp.allclose(pred2, reference_forward_bf16(emb2, w1, b1, w2, b2),
                        atol=1e-4, rtol=1e-4)

    print("KERNEL_OK")
</pallas_src>

<mosaic_0001>
module attributes {stable_mosaic.version = 11 : i64} {
  func.func @_classifier_kernel(%arg0: i32, %arg1: memref<8x256xf32, #tpu.memory_space<vmem>>, %arg2: memref<256x64xbf16, #tpu.memory_space<vmem>>, %arg3: memref<1x64xf32, #tpu.memory_space<vmem>>, %arg4: memref<64x128xbf16, #tpu.memory_space<vmem>>, %arg5: memref<1x2xf32, #tpu.memory_space<vmem>>, %arg6: memref<8x2xf32, #tpu.memory_space<vmem>>) attributes {dimension_semantics = [#tpu.dimension_semantics<parallel>], iteration_bounds = array<i64: 1>, scalar_prefetch = 0 : i64, scratch_operands = 0 : i64, tpu.core_type = #tpu.core_type<tc>, window_params = [{transform_indices = @transform_0, window_bounds = array<i64: 8, 256>}, {pipeline_mode = #tpu.pipeline_mode<synchronous>, transform_indices = @transform_1, window_bounds = array<i64: 256, 64>}, {pipeline_mode = #tpu.pipeline_mode<synchronous>, transform_indices = @transform_2, window_bounds = array<i64: 1, 64>}, {pipeline_mode = #tpu.pipeline_mode<synchronous>, transform_indices = @transform_3, window_bounds = array<i64: 64, 128>}, {pipeline_mode = #tpu.pipeline_mode<synchronous>, transform_indices = @transform_4, window_bounds = array<i64: 1, 2>}, {transform_indices = @transform_5, window_bounds = array<i64: 8, 2>}]} {
    %c0 = arith.constant 0 : index
    %c0_0 = arith.constant 0 : index
    %0 = vector.load %arg1[%c0, %c0_0] : memref<8x256xf32, #tpu.memory_space<vmem>>, vector<8x256xf32>
    %1 = arith.truncf %0 : vector<8x256xf32> to vector<8x256xbf16>
    %c0_1 = arith.constant 0 : index
    %c0_2 = arith.constant 0 : index
    %2 = vector.load %arg2[%c0_1, %c0_2] : memref<256x64xbf16, #tpu.memory_space<vmem>>, vector<256x64xbf16>
    %cst = arith.constant dense<0.000000e+00> : vector<8x64xf32>
    %3 = tpu.matmul %1, %2, %cst {dimension_numbers = #tpu.dot_dimension_numbers<[1], [0], [0], [1], [0, 0, 1, 1], [], []>} : vector<8x256xbf16>, vector<256x64xbf16>, vector<8x64xf32> -> vector<8x64xf32>
    %c0_3 = arith.constant 0 : index
    %c0_4 = arith.constant 0 : index
    %4 = vector.load %arg3[%c0_3, %c0_4] : memref<1x64xf32, #tpu.memory_space<vmem>>, vector<1x64xf32>
    %5 = vector.broadcast %4 : vector<1x64xf32> to vector<8x64xf32>
    %6 = arith.addf %3, %5 : vector<8x64xf32>
    %7 = arith.negf %6 : vector<8x64xf32>
    %8 = math.exp %7 : vector<8x64xf32>
    %cst_5 = arith.constant 1.000000e+00 : f32
    %9 = vector.broadcast %cst_5 : f32 to vector<8x64xf32>
    %10 = arith.addf %9, %8 : vector<8x64xf32>
    %11 = arith.divf %9, %10 : vector<8x64xf32>
    %12 = arith.truncf %11 : vector<8x64xf32> to vector<8x64xbf16>
    %c0_6 = arith.constant 0 : index
    %c0_7 = arith.constant 0 : index
    %13 = vector.load %arg4[%c0_6, %c0_7] : memref<64x128xbf16, #tpu.memory_space<vmem>>, vector<64x128xbf16>
    %cst_8 = arith.constant dense<0.000000e+00> : vector<8x128xf32>
    %14 = tpu.matmul %12, %13, %cst_8 {dimension_numbers = #tpu.dot_dimension_numbers<[1], [0], [0], [1], [0, 0, 1, 1], [], []>} : vector<8x64xbf16>, vector<64x128xbf16>, vector<8x128xf32> -> vector<8x128xf32>
    %15 = vector.extract_strided_slice %14 {offsets = [0, 0], sizes = [8, 2], strides = [1, 1]} : vector<8x128xf32> to vector<8x2xf32>
    %c0_9 = arith.constant 0 : index
    %c0_10 = arith.constant 0 : index
    %16 = vector.load %arg5[%c0_9, %c0_10] : memref<1x2xf32, #tpu.memory_space<vmem>>, vector<1x2xf32>
    %17 = vector.broadcast %16 : vector<1x2xf32> to vector<8x2xf32>
    %18 = arith.addf %15, %17 : vector<8x2xf32>
    %c0_11 = arith.constant 0 : index
    %c0_12 = arith.constant 0 : index
    %19 = vector.load %arg6[%c0_11, %c0_12] : memref<8x2xf32, #tpu.memory_space<vmem>>, vector<8x2xf32>
    tpu.vector_store %arg6[%c0_11, %c0_12], %18 {strides = array<i32>} : memref<8x2xf32, #tpu.memory_space<vmem>>, vector<8x2xf32>,
    return
  }
  func.func @transform_0(%arg0: i32) -> (i32, i32) {
    %c0_i32 = arith.constant 0 : i32
    %c0_i32_0 = arith.constant 0 : i32
    return %arg0, %c0_i32 : i32, i32
  }
  func.func @transform_1(%arg0: i32) -> (i32, i32) {
    %c0_i32 = arith.constant 0 : i32
    %c0_i32_0 = arith.constant 0 : i32
    %c0_i32_1 = arith.constant 0 : i32
    return %c0_i32, %c0_i32_0 : i32, i32
  }
  func.func @transform_2(%arg0: i32) -> (i32, i32) {
    %c0_i32 = arith.constant 0 : i32
    %c0_i32_0 = arith.constant 0 : i32
    %c0_i32_1 = arith.constant 0 : i32
    return %c0_i32, %c0_i32_0 : i32, i32
  }
  func.func @transform_3(%arg0: i32) -> (i32, i32) {
    %c0_i32 = arith.constant 0 : i32
    %c0_i32_0 = arith.constant 0 : i32
    %c0_i32_1 = arith.constant 0 : i32
    return %c0_i32, %c0_i32_0 : i32, i32
  }
  func.func @transform_4(%arg0: i32) -> (i32, i32) {
    %c0_i32 = arith.constant 0 : i32
    %c0_i32_0 = arith.constant 0 : i32
    %c0_i32_1 = arith.constant 0 : i32
    return %c0_i32, %c0_i32_0 : i32, i32
  }
  func.func @transform_5(%arg0: i32) -> (i32, i32) {
    %c0_i32 = arith.constant 0 : i32
    %c0_i32_0 = arith.constant 0 : i32
    return %arg0, %c0_i32 : i32, i32
  }
}

</mosaic_0001>

<llo_original>
// kernel: target_classifier_forward.1
$region0: #{target_classifier_forward.1}
  #allocation0 [shape = 'u32[]', space=smem, size = 0x4, offset = 0x4, fixed_abs, tag = 'smem constant byte address 0x4 - core index']
  #allocation1 [shape = 'u32[72,128]{1,0:T(1,128)}', space=vmem, size = 0x9000, scoped, tag = 'internal scratch']
  %s0 = inlined_call_operand.vmem [shape: f32[2,256], index: 0, kind: input, shape index: {}]
  %s1 = inlined_call_operand.vmem [shape: bf16[256,64], index: 1, kind: input, shape index: {}]
  %s2 = inlined_call_operand.vmem [shape: f32[1,64], index: 2, kind: input, shape index: {}]
  %s3 = inlined_call_operand.vmem [shape: bf16[64,128], index: 3, kind: input, shape index: {}]
  %s4 = inlined_call_operand.vmem [shape: f32[1,2], index: 4, kind: input, shape index: {}]
  %s5 = inlined_call_operand.hbm [shape: f32[2,2], index: 5, kind: output, shape index: {}]
  %s6 = sld [smem:[#allocation0]]
  $region30: #{target_classifier_forward.1} parent=0
    _
  %s8 = ssub.s32 1, %s6
  %s9 = scalar_select 0, %s8, %s6
  $region1: #{target_classifier_forward.1} parent=0
    #allocation2 [shape = 'u8[4096]{0}', space=vmem, size = 0x1000, scoped, tag = 'output window, operand 0, single buffered']
    #allocation3 [shape = 's32[1]{0}', space=sflag, size = 0x4, scoped, tag = 'scoped memory for target_classifier_forward.1']
    %10 = vsyncpa [#allocation3], 0
    // Predicated region
    $region2: #{target_classifier_forward.1} parent=1 // pred_check
      _
    $region3: #{target_classifier_forward.1} parent=1 // pred_check_branch
      %12 = sbr.rel (0) target = $region5
    $region4: #{target_classifier_forward.1} parent=1 // pred_region
      _
    $region5: #{target_classifier_forward.1} parent=1 // pred_fallthru
      _
    // Predicated region
    $region6: #{target_classifier_forward.1} parent=1 // pred_check
      _
    $region7: #{target_classifier_forward.1} parent=1 // pred_check_branch
      %14 = sbr.rel (0) target = $region9
    $region8: #{target_classifier_forward.1} parent=1 // pred_region
      _
    $region9: #{target_classifier_forward.1} parent=1 // pred_fallthru
      _
    // Predicated region
    $region10: #{target_classifier_forward.1} parent=1 // pred_check
      _
    $region11: #{target_classifier_forward.1} parent=1 // pred_check_branch
      %16 = sbr.rel (0) target = $region13
    $region12: #{target_classifier_forward.1} parent=1 // pred_region
      _
    $region13: #{target_classifier_forward.1} parent=1 // pred_fallthru
      _
    // Predicated region
    $region14: #{target_classifier_forward.1} parent=1 // pred_check
      _
    $region15: #{target_classifier_forward.1} parent=1 // pred_check_branch
      %18 = sbr.rel (0) target = $region17
    $region16: #{target_classifier_forward.1} parent=1 // pred_region
      _
    $region17: #{target_classifier_forward.1} parent=1 // pred_fallthru
      _
    // Predicated region
    $region18: #{target_classifier_forward.1} parent=1 // pred_check
      _
    $region19: #{target_classifier_forward.1} parent=1 // pred_check_branch
      %20 = sbr.rel (0) target = $region21
    $region20: #{target_classifier_forward.1} parent=1 // pred_region
      _
    $region21: #{target_classifier_forward.1} parent=1 // pred_fallthru
      _
    %v22 = vld [vmem:[%s0] sm:$0xf]
    %v23 = vld [vmem:[%s0 + $0x4] sm:$0xf]
    %v24 = vld [vmem:[%s0 + $0x8] sm:$0xf]
    %v25 = vld [vmem:[%s0 + $0xc] sm:$0xf]
    %30 = vst [vmem:[#allocation1] ss:$4 sm:$0xff] %v22
    %s31 = scalar_lea.vmem [#allocation1], 1
    %32 = vst [vmem:[%s31] ss:$4 sm:$0xff] %v23
    %s33 = scalar_lea.vmem [#allocation1], 2
    %34 = vst [vmem:[%s33] ss:$4 sm:$0xff] %v24
    %s35 = scalar_lea.vmem [#allocation1], 3
    %36 = vst [vmem:[%s35] ss:$4 sm:$0xff] %v25
    %v37 = vld.sshfl [vmem:[#allocation1] sm:$0xff pattern:$0x73625140]
    %v38 = vld.sshfl [vmem:[#allocation1 + $0x8] sm:$0xff pattern:$0x73625140]
    %v41 = vpack.c.bf16 %v37, %v37
    %v42 = vpack.c.bf16 %v38, %v38
    %v43 = vld [vmem:[%s1] sm:$0xf]
    %v44 = vld [vmem:[%s1 + $0x4] sm:$0xf]
    %v45 = vld [vmem:[%s1 + $0x8] sm:$0xf]
    %v46 = vld [vmem:[%s1 + $0xc] sm:$0xf]
    %v47 = vld [vmem:[%s1 + $0x10] sm:$0xf]
    %v48 = vld [vmem:[%s1 + $0x14] sm:$0xf]
    %v49 = vld [vmem:[%s1 + $0x18] sm:$0xf]
    %v50 = vld [vmem:[%s1 + $0x1c] sm:$0xf]
    %v51 = vld [vmem:[%s1 + $0x20] sm:$0xf]
    %v52 = vld [vmem:[%s1 + $0x24] sm:$0xf]
    %v53 = vld [vmem:[%s1 + $0x28] sm:$0xf]
    %v54 = vld [vmem:[%s1 + $0x2c] sm:$0xf]
    %v55 = vld [vmem:[%s1 + $0x30] sm:$0xf]
    %v56 = vld [vmem:[%s1 + $0x34] sm:$0xf]
    %v57 = vld [vmem:[%s1 + $0x38] sm:$0xf]
    %v58 = vld [vmem:[%s1 + $0x3c] sm:$0xf]
    %v59 = vld [vmem:[%s1 + $0x40] sm:$0xf]
    %v60 = vld [vmem:[%s1 + $0x44] sm:$0xf]
    %v61 = vld [vmem:[%s1 + $0x48] sm:$0xf]
    %v62 = vld [vmem:[%s1 + $0x4c] sm:$0xf]
    %v63 = vld [vmem:[%s1 + $0x50] sm:$0xf]
    %v64 = vld [vmem:[%s1 + $0x54] sm:$0xf]
    %v65 = vld [vmem:[%s1 + $0x58] sm:$0xf]
    %v66 = vld [vmem:[%s1 + $0x5c] sm:$0xf]
    %v67 = vld [vmem:[%s1 + $0x60] sm:$0xf]
    %v68 = vld [vmem:[%s1 + $0x64] sm:$0xf]
    %v69 = vld [vmem:[%s1 + $0x68] sm:$0xf]
    %v70 = vld [vmem:[%s1 + $0x6c] sm:$0xf]
    %v71 = vld [vmem:[%s1 + $0x70] sm:$0xf]
    %v72 = vld [vmem:[%s1 + $0x74] sm:$0xf]
    %v73 = vld [vmem:[%s1 + $0x78] sm:$0xf]
    %v74 = vld [vmem:[%s1 + $0x7c] sm:$0xf]
    %v75 = vld [vmem:[%s2] sm:$0x1]
    %v77 = vperm.slane %v75, 0
    %v111 = vunpack.c.l.b16 %v43
    %v112 = vunpack.c.l.b16 %v44
    %v113 = vunpack.c.l.b16 %v45
    %v114 = vunpack.c.l.b16 %v46
    %v115 = vunpack.c.l.b16 %v47
    %v116 = vunpack.c.l.b16 %v48
    %v117 = vunpack.c.l.b16 %v49
    %v118 = vunpack.c.l.b16 %v50
    %v119 = vunpack.c.l.b16 %v51
    %v120 = vunpack.c.l.b16 %v52
    %v121 = vunpack.c.l.b16 %v53
    %v122 = vunpack.c.l.b16 %v54
    %v123 = vunpack.c.l.b16 %v55
    %v124 = vunpack.c.l.b16 %v56
    %v125 = vunpack.c.l.b16 %v57
    %v126 = vunpack.c.l.b16 %v58
    %v127 = vunpack.c.l.b16 %v59
    %v128 = vunpack.c.l.b16 %v60
    %v129 = vunpack.c.l.b16 %v61
    %v130 = vunpack.c.l.b16 %v62
    %v131 = vunpack.c.l.b16 %v63
    %v132 = vunpack.c.l.b16 %v64
    %v133 = vunpack.c.l.b16 %v65
    %v134 = vunpack.c.l.b16 %v66
    %v135 = vunpack.c.l.b16 %v67
    %v136 = vunpack.c.l.b16 %v68
    %v137 = vunpack.c.l.b16 %v69
    %v138 = vunpack.c.l.b16 %v70
    %v139 = vunpack.c.l.b16 %v71
    %v140 = vunpack.c.l.b16 %v72
    %v141 = vunpack.c.l.b16 %v73
    %v142 = vunpack.c.l.b16 %v74
    %v143 = vpack.c.b16 %v112, %v111
    %v144 = vpack.c.b16 %v114, %v113
    %v145 = vpack.c.b16 %v116, %v115
    %v146 = vpack.c.b16 %v118, %v117
    %v147 = vpack.c.b16 %v120, %v119
    %v148 = vpack.c.b16 %v122, %v121
    %v149 = vpack.c.b16 %v124, %v123
    %v150 = vpack.c.b16 %v126, %v125
    %v151 = vpack.c.b16 %v128, %v127
    %v152 = vpack.c.b16 %v130, %v129
    %v153 = vpack.c.b16 %v132, %v131
    %v154 = vpack.c.b16 %v134, %v133
    %v155 = vpack.c.b16 %v136, %v135
    %v156 = vpack.c.b16 %v138, %v137
    %v157 = vpack.c.b16 %v140, %v139
    %v158 = vpack.c.b16 %v142, %v141
    %175 = vmatpush.bf16.msra.mxu0 %v150
    %176 = vmatpush.bf16.msra.mxu0 %v149
    %177 = vmatpush.bf16.msra.mxu0 %v148
    %178 = vmatpush.bf16.msra.mxu0 %v147
    %179 = vmatpush.bf16.msra.mxu0 %v146
    %180 = vmatpush.bf16.msra.mxu0 %v145
    %181 = vmatpush.bf16.msra.mxu0 %v144
    %182 = vmatpush.bf16.msra.mxu0 %v143
    %183 = vmatmul.bf16.gmra.mxu0 %v41
    %v184 = vpop.f32.mrf.mxu0
    %v185 = vadd.f32 %v77, %v184
    %v186 = vpop.f32.mrf.mxu0
    %187 = vdwg.mxu0
    %188 = vmatpush.bf16.msra.mxu0 %v158
    %189 = vmatpush.bf16.msra.mxu0 %v157
    %190 = vmatpush.bf16.msra.mxu0 %v156
    %191 = vmatpush.bf16.msra.mxu0 %v155
    %192 = vmatpush.bf16.msra.mxu0 %v154
    %193 = vmatpush.bf16.msra.mxu0 %v153
    %194 = vmatpush.bf16.msra.mxu0 %v152
    %195 = vmatpush.bf16.msra.mxu0 %v151
    %196 = vmatmul.bf16.gmra.mxu0 %v42
    %v197 = vpop.f32.mrf.mxu0
    %v198 = vadd.f32 %v185, %v197
    %v199 = vpop.f32.mrf.mxu0
    %200 = vdwg.mxu0
    %v201 = vxor.u32 %v198, 2147483648
    %v202 = vmul.f32 %v201, 1.442695
    %v203 = vpow.pop %v202
    %v204 = vadd.f32 %v203, 1.0
    %v205 = vrcp.pop %v204
    %v206 = vmul.f32 %v204, %v205
    %v207 = vsub.f32 1.0, %v206
    %v208 = vmul.f32 %v205, %v207
    %v209 = vadd.f32 %v205, %v208
    %vm210 = vweird.f32 %v204
    %vm211 = vweird.f32 %v205
    %vm212 = vmor %vm210, %vm211
    %v213 = vsel %vm212, %v205, %v209
    %v214 = vand.u32 2147483647, %v204
    %vm215 = vcmp.eq.f32.partialorder %v214, 8.507059e+37
    %v216 = vand.u32 %v204, 2147483648
    %v217 = vor.u32 1.1754944e-38, %v216
    %v218 = vsel %vm215, %v217, %v213
    %v219 = vmul.f32 1.0, %v218
    %v220 = vpack.c.bf16 %v219, %v219
    %v221 = vld [vmem:[%s3] sm:$0xf]
    %v222 = vld [vmem:[%s3 + $0x4] sm:$0xf]
    %v223 = vld [vmem:[%s3 + $0x8] sm:$0xf]
    %v224 = vld [vmem:[%s3 + $0xc] sm:$0xf]
    %v225 = vld [vmem:[%s3 + $0x10] sm:$0xf]
    %v226 = vld [vmem:[%s3 + $0x14] sm:$0xf]
    %v227 = vld [vmem:[%s3 + $0x18] sm:$0xf]
    %v228 = vld [vmem:[%s3 + $0x1c] sm:$0xf]
    %v237 = vunpack.c.l.b16 %v221
    %v238 = vunpack.c.l.b16 %v222
    %v239 = vunpack.c.l.b16 %v223
    %v240 = vunpack.c.l.b16 %v224
    %v241 = vunpack.c.l.b16 %v225
    %v242 = vunpack.c.l.b16 %v226
    %v243 = vunpack.c.l.b16 %v227
    %v244 = vunpack.c.l.b16 %v228
    %v245 = vpack.c.b16 %v238, %v237
    %v246 = vpack.c.b16 %v240, %v239
    %v247 = vpack.c.b16 %v242, %v241
    %v248 = vpack.c.b16 %v244, %v243
    %vm253 = vcmask 523264
    %v255 = vsel %vm253, %v220, 0
    %257 = vmatpush.bf16.msra.mxu0 0
    %258 = vmatpush.bf16.msra.mxu0 0
    %259 = vmatpush.bf16.msra.mxu0 0
    %260 = vmatpush.bf16.msra.mxu0 0
    %261 = vmatpush.bf16.msra.mxu0 %v248
    %262 = vmatpush.bf16.msra.mxu0 %v247
    %263 = vmatpush.bf16.msra.mxu0 %v246
    %264 = vmatpush.bf16.msra.mxu0 %v245
    %265 = vmatmul.bf16.gmra.mxu0 %v255
    %v266 = vpop.f32.mrf.mxu0
    %v267 = vadd.f32 0.0, %v266
    %v268 = vpop.f32.mrf.mxu0
    %269 = vdwg.mxu0
    %v270 = vld [vmem:[%s4] sm:$0x1]
    %v272 = vperm.slane %v270, 0
    %v274 = vadd.f32 %v267, %v272
    %vm275 = vcmask 15360
    %276 = vst.msk [vmem:[#allocation2] sm:$0xff] %vm275, %v274
    // Predicated region
    $region22: #{target_classifier_forward.1} parent=1 // pred_check
      _
    $region23: #{target_classifier_forward.1} parent=1 // pred_check_branch
      %278 = sbr.rel (0) target = $region25
    $region24: #{target_classifier_forward.1} parent=1 // pred_region
      %280 = vsyncadd [#allocation3], 96
      %s281 = sshll.u32 [#allocation2], 4
      %s282 = int_to_ptr.vmem [resolvable:$true] %s281
      %s283 = sshll.u32 %s5, 4
      %s284 = int_to_ptr.hbm [resolvable:$true] %s283
      %289 = dma.vmem_to_hbm [thread:$0]  %s282, 32, %s284, [#allocation3], 32, 32, 2
    $region25: #{target_classifier_forward.1} parent=1 // pred_fallthru
      _
    // Predicated region
    $region26: #{target_classifier_forward.1} parent=1 // pred_check
      _
    $region27: #{target_classifier_forward.1} parent=1 // pred_check_branch
      %291 = sbr.rel (0) target = $region29
    $region28: #{target_classifier_forward.1} parent=1 // pred_region
      %293 = dma.done [#allocation3], 128
    $region29: #{target_classifier_forward.1} parent=1 // pred_fallthru
      _
    %294 = vsyncpa [#allocation3], 1

</llo_original>
